<compile_context>
chip_gen: v7x
topology: tpu7x:2x2x1
jax: 0.10.0
libtpu: 0.0.40
codegen_flags: <defaults>
</compile_context>

<pallas_src>
import functools

import jax
import jax.numpy as jnp
from jax.experimental import pallas as pl
from jax.experimental.pallas import tpu as pltpu

EPS = 1e-5  # nn.LayerNorm default
VMEM_LIMIT = 32 * 1024 * 1024


# ----------------------------- in-kernel math ------------------------------

def _erf(x):
    # Abramowitz & Stegun 7.1.26 (max abs err ~1.5e-7); exp/reciprocal only.
    a1, a2, a3, a4, a5 = 0.254829592, -0.284496736, 1.421413741, -1.453152027, 1.061405429
    p = 0.3275911
    s = jnp.where(x < 0.0, -1.0, 1.0)
    ax = jnp.abs(x)
    t = pl.reciprocal(1.0 + p * ax, approx=True)   # EUP slot, VPU-free
    poly = ((((a5 * t + a4) * t + a3) * t + a2) * t + a1) * t
    return s - s * (poly * jnp.exp(-ax * ax))


def _gelu(x):
    # exact (erf-based) GELU, matching torch.nn.GELU() default
    return 0.5 * x * (1.0 + _erf(x * 0.7071067811865476))


def _layernorm(x, g, b):
    mu = jnp.mean(x, axis=-1, keepdims=True)
    var = jnp.mean(jnp.square(x - mu), axis=-1, keepdims=True)
    return (x - mu) * jax.lax.rsqrt(var + EPS) * g + b


def _pool3_same(x, axis):
    """3-tap max along `axis`, stride 1, SAME padding (separable pool step)."""
    n = x.shape[axis]
    pad_shape = list(x.shape)
    pad_shape[axis] = 1
    neg = jnp.full(pad_shape, -jnp.inf, x.dtype)
    fwd = jnp.concatenate(
        [neg, jax.lax.slice_in_dim(x, 0, n - 1, axis=axis)], axis=axis)
    bwd = jnp.concatenate(
        [jax.lax.slice_in_dim(x, 1, n, axis=axis), neg], axis=axis)
    return jnp.maximum(x, jnp.maximum(fwd, bwd))


# --------------------- kernel 1: Patch_Expanding (upsample) ----------------

def _patch_expand_kernel(x_ref, g_ref, b_ref, w_ref, bias_ref, o_ref):
    # x_ref: (TM, 2C)  w_ref: (2C, 8*C) bf16  o_ref: (TM, 8*C) f32
    xn = _layernorm(x_ref[...], g_ref[...], b_ref[...])
    o_ref[...] = (jnp.dot(xn.astype(jnp.bfloat16), w_ref[...],
                          preferred_element_type=jnp.float32)
                  + bias_ref[...])


def _pick_tile(m, cap=1024):
    if m <= cap:
        return m
    for t in range(cap, 7, -1):
        if m % t == 0 and t % 8 == 0:
            return t
    return m


def patch_expand(x2d, g, b, w_bf16, bias):
    M, Cin = x2d.shape
    Cout8 = w_bf16.shape[1]
    tm = _pick_tile(M)
    assert M % tm == 0
    return pl.pallas_call(
        _patch_expand_kernel,
        out_shape=jax.ShapeDtypeStruct((M, Cout8), jnp.float32),
        grid=(M // tm,),
        in_specs=[
            pl.BlockSpec((tm, Cin), lambda i: (i, 0)),
            pl.BlockSpec((1, Cin), lambda i: (0, 0)),
            pl.BlockSpec((1, Cin), lambda i: (0, 0)),
            pl.BlockSpec((Cin, Cout8), lambda i: (0, 0)),
            pl.BlockSpec((1, Cout8), lambda i: (0, 0)),
        ],
        out_specs=pl.BlockSpec((tm, Cout8), lambda i: (i, 0)),
        compiler_params=pltpu.CompilerParams(
            dimension_semantics=("parallel",),
            vmem_limit_bytes=VMEM_LIMIT),
        cost_estimate=pl.CostEstimate(
            flops=2 * M * Cin * Cout8,
            transcendentals=0,
            bytes_accessed=4 * M * (Cin + Cout8) + 2 * Cin * Cout8),
    )(x2d, g, b, w_bf16, bias)


# ----------------------- kernel 2: OperationBlock --------------------------
# [optional +skip] -> norm1 -> MaxPool3d(3,1,1) -> norm -> GELU -> +residual
#                  -> norm2 -> MLP -> +residual

def _op_block_kernel(*refs, add_skip):
    if add_skip:
        (x_ref, skip_ref, g1_ref, b1_ref, gp_ref, bp_ref, g2_ref, b2_ref,
         w1_ref, bb1_ref, w2_ref, bb2_ref, o_ref) = refs
    else:
        (x_ref, g1_ref, b1_ref, gp_ref, bp_ref, g2_ref, b2_ref,
         w1_ref, bb1_ref, w2_ref, bb2_ref, o_ref) = refs

    S, H, W, C = x_ref.shape
    x = x_ref[...]
    if add_skip:
        x = x + skip_ref[...]          # fused skip-add (x_up += skip)

    xn = _layernorm(x, g1_ref[...], b1_ref[...])     # norm1

    # separable 3x3x3 max-pool, stride 1, SAME padding: W, then H, then S
    pooled = _pool3_same(xn, axis=2)
    pooled = _pool3_same(pooled, axis=1)
    pooled = _pool3_same(pooled, axis=0)

    # SinglePool3DBlock's LayerNorm + GELU
    pg = _gelu(_layernorm(pooled, gp_ref[...], bp_ref[...]))

    # residual 1
    y = x + pg

    # MLP branch: norm2 -> fc1 -> GELU -> fc2 (bf16 MXU operands, f32 accum)
    z = _layernorm(y, g2_ref[...], b2_ref[...]).reshape(S * H * W, C)
    h = _gelu(jnp.dot(z.astype(jnp.bfloat16), w1_ref[...],
                      preferred_element_type=jnp.float32) + bb1_ref[...])
    m = (jnp.dot(h.astype(jnp.bfloat16), w2_ref[...],
                 preferred_element_type=jnp.float32) + bb2_ref[...])

    o_ref[...] = y + m.reshape(S, H, W, C)


def op_block(x5d, p, skip=None):
    B, S, H, W, C = x5d.shape
    HD = p["w1"].shape[1]
    L2 = S * H * W

    data_spec = pl.BlockSpec((None, S, H, W, C), lambda b: (b, 0, 0, 0, 0))

    def full(shape):
        return pl.BlockSpec(shape, lambda b: (0,) * len(shape))

    in_specs = [data_spec]
    args = [x5d]
    if skip is not None:
        in_specs.append(data_spec)
        args.append(skip)
    in_specs += [
        full((1, C)), full((1, C)),       # norm1
        full((1, C)), full((1, C)),       # pool-block norm
        full((1, C)), full((1, C)),       # norm2
        full((C, HD)), full((1, HD)),     # fc1
        full((HD, C)), full((1, C)),      # fc2
    ]
    args += [p["g1"], p["b1"], p["gp"], p["bp"], p["g2"], p["b2"],
             p["w1"].astype(jnp.bfloat16), p["bb1"],
             p["w2"].astype(jnp.bfloat16), p["bb2"]]

    kernel = functools.partial(_op_block_kernel, add_skip=skip is not None)

    return pl.pallas_call(
        kernel,
        out_shape=jax.ShapeDtypeStruct((B, S, H, W, C), jnp.float32),
        grid=(B,),
        in_specs=in_specs,
        out_specs=data_spec,
        compiler_params=pltpu.CompilerParams(
            dimension_semantics=("parallel",),
            vmem_limit_bytes=VMEM_LIMIT),
        cost_estimate=pl.CostEstimate(
            flops=4 * B * L2 * C * HD + 80 * B * L2 * C,
            transcendentals=2 * B * L2 * (C + HD),
            bytes_accessed=4 * B * L2 * C * (4 if skip is not None else 3)
            + 4 * C * HD),
    )(*args)


# ------------------------------ full forward -------------------------------

def basic_layer_up_forward(x, skip, S, H, W, params):
    """x: (B, S*H*W, 2*dim), skip: (B, 8*S*H*W, dim).  Returns ((B, dim, 8L), S2, H2, W2)."""
    B, L, Cin = x.shape
    C = Cin // 2
    up = params["up"]
    assert len(params["blocks"]) >= 1, "skip-add is fused into block 0"

    # Patch_Expanding: LayerNorm + ConvTranspose3d(2C->C, k=2, s=2) as matmul.
    # torch weight layout (in, out, kS, kH, kW) -> (in, kS*kH*kW*out), bf16.
    wm = jnp.transpose(up["wt"], (0, 2, 3, 4, 1)).reshape(Cin, 8 * C)
    wm = wm.astype(jnp.bfloat16)
    bias_m = jnp.tile(up["bias"], 8).reshape(1, 8 * C)
    y = patch_expand(x.reshape(B * L, Cin), up["g"].reshape(1, Cin),
                     up["b"].reshape(1, Cin), wm, bias_m)

    # scatter the 8 sub-voxels to the upsampled grid (single XLA transpose)
    y = y.reshape(B, S, H, W, 2, 2, 2, C)
    y = jnp.transpose(y, (0, 1, 4, 2, 5, 3, 6, 7))   # (B, S,2, H,2, W,2, C)
    S2, H2, W2 = 2 * S, 2 * H, 2 * W
    L2 = S2 * H2 * W2
    x5 = y.reshape(B, S2, H2, W2, C)
    skip5 = skip.reshape(B, S2, H2, W2, C)

    # OperationBlocks; block 0 also performs the fused `x_up += skip`
    for bi, p in enumerate(params["blocks"]):
        x5 = op_block(x5, p, skip=skip5 if bi == 0 else None)

    out = jnp.transpose(x5.reshape(B, L2, C), (0, 2, 1))   # (B, C, L) like torch
    return out, S2, H2, W2


# ----------------------------- parameter init ------------------------------

def init_params(key, dim, depth, mlp_ratio=4.0):
    C, Cin, HD = dim, 2 * dim, int(dim * mlp_ratio)
    keys = iter(jax.random.split(key, 4 + depth * 10))

    def rn(shape, scale):
        return (scale * jax.random.normal(next(keys), shape)).astype(jnp.float32)

    up = dict(g=1.0 + rn((Cin,), 0.1), b=rn((Cin,), 0.1),
              wt=rn((Cin, C, 2, 2, 2), 0.02), bias=rn((C,), 0.02))
    blocks = []
    for _ in range(depth):
        blocks.append(dict(
            g1=1.0 + rn((1, C), 0.1), b1=rn((1, C), 0.1),
            gp=1.0 + rn((1, C), 0.1), bp=rn((1, C), 0.1),
            g2=1.0 + rn((1, C), 0.1), b2=rn((1, C), 0.1),
            w1=rn((C, HD), 0.05), bb1=rn((1, HD), 0.02),
            w2=rn((HD, C), 0.05), bb2=rn((1, C), 0.02),
        ))
    return dict(up=up, blocks=blocks)


# -------------------------- pure-JAX reference -----------------------------

def _ln_ref(x, g, b):
    mu = jnp.mean(x, -1, keepdims=True)
    var = jnp.mean((x - mu) ** 2, -1, keepdims=True)
    return (x - mu) * jax.lax.rsqrt(var + EPS) * g + b


def ref_forward(x, skip, S, H, W, params):
    B, L, Cin = x.shape
    C = Cin // 2
    up = params["up"]
    xn = _ln_ref(x, up["g"], up["b"]).reshape(B, S, H, W, Cin)
    y = jnp.einsum("bshwi,iodef->bsdhewfo", xn, up["wt"]) + up["bias"]
    S2, H2, W2 = 2 * S, 2 * H, 2 * W
    L2 = S2 * H2 * W2
    y = y.reshape(B, L2, C) + skip
    for p in params["blocks"]:
        xln = _ln_ref(y, p["g1"], p["b1"]).reshape(B, S2, H2, W2, C)
        pooled = jax.lax.reduce_window(
            xln, -jnp.inf, jax.lax.max,
            window_dimensions=(1, 3, 3, 3, 1), window_strides=(1,) * 5,
            padding=((0, 0), (1, 1), (1, 1), (1, 1), (0, 0)))
        pg = jax.nn.gelu(_ln_ref(pooled, p["gp"], p["bp"]), approximate=False)
        y = y + pg.reshape(B, L2, C)
        z = _ln_ref(y, p["g2"], p["b2"])
        h = jax.nn.gelu(z @ p["w1"] + p["bb1"], approximate=False)
        y = y + (h @ p["w2"] + p["bb2"])
    return jnp.transpose(y, (0, 2, 1)), S2, H2, W2


# ---------------------------------- main ------------------------------------

if __name__ == "__main__":
    B, dim, depth = 2, 16, 2
    S = H = W = 4
    Cin = 2 * dim
    L = S * H * W

    key = jax.random.PRNGKey(0)
    kx, ksk, kp = jax.random.split(key, 3)
    x = jax.random.normal(kx, (B, L, Cin), jnp.float32)
    skip = jax.random.normal(ksk, (B, 8 * L, dim), jnp.float32)
    params = init_params(kp, dim, depth, mlp_ratio=4.0)

    out, S2, H2, W2 = basic_layer_up_forward(x, skip, S, H, W, params)
    out = jax.block_until_ready(out)

    assert out.shape == (B, dim, 8 * L), out.shape
    assert (S2, H2, W2) == (2 * S, 2 * H, 2 * W)

    # Reference is pure f32; the Pallas kernels use bf16 MXU operands and the
    # approximate EUP reciprocal inside erf, hence the slightly loose tolerance.
    ref, *_ = ref_forward(x, skip, S, H, W, params)
    if not jnp.allclose(out, ref, atol=3e-2, rtol=3e-2):
        err = float(jnp.max(jnp.abs(out - ref)))
        raise AssertionError(f"Pallas output mismatch vs reference, max abs err={err}")

    print("KERNEL_OK")
</pallas_src>

<mosaic_0001>
module attributes {stable_mosaic.version = 11 : i64} {
  func.func @_patch_expand_kernel(%arg0: i32, %arg1: memref<128x32xf32, #tpu.memory_space<vmem>>, %arg2: memref<1x32xf32, #tpu.memory_space<vmem>>, %arg3: memref<1x32xf32, #tpu.memory_space<vmem>>, %arg4: memref<32x128xbf16, #tpu.memory_space<vmem>>, %arg5: memref<1x128xf32, #tpu.memory_space<vmem>>, %arg6: memref<128x128xf32, #tpu.memory_space<vmem>>) attributes {dimension_semantics = [#tpu.dimension_semantics<parallel>], iteration_bounds = array<i64: 1>, scalar_prefetch = 0 : i64, scratch_operands = 0 : i64, tpu.core_type = #tpu.core_type<tc>, window_params = [{transform_indices = @transform_0, window_bounds = array<i64: 128, 32>}, {pipeline_mode = #tpu.pipeline_mode<synchronous>, transform_indices = @transform_1, window_bounds = array<i64: 1, 32>}, {pipeline_mode = #tpu.pipeline_mode<synchronous>, transform_indices = @transform_2, window_bounds = array<i64: 1, 32>}, {pipeline_mode = #tpu.pipeline_mode<synchronous>, transform_indices = @transform_3, window_bounds = array<i64: 32, 128>}, {pipeline_mode = #tpu.pipeline_mode<synchronous>, transform_indices = @transform_4, window_bounds = array<i64: 1, 128>}, {transform_indices = @transform_5, window_bounds = array<i64: 128, 128>}]} {
    %c0 = arith.constant 0 : index
    %c0_0 = arith.constant 0 : index
    %0 = vector.load %arg1[%c0, %c0_0] : memref<128x32xf32, #tpu.memory_space<vmem>>, vector<128x32xf32>
    %c0_1 = arith.constant 0 : index
    %c0_2 = arith.constant 0 : index
    %1 = vector.load %arg2[%c0_1, %c0_2] : memref<1x32xf32, #tpu.memory_space<vmem>>, vector<1x32xf32>
    %c0_3 = arith.constant 0 : index
    %c0_4 = arith.constant 0 : index
    %2 = vector.load %arg3[%c0_3, %c0_4] : memref<1x32xf32, #tpu.memory_space<vmem>>, vector<1x32xf32>
    %cst = arith.constant dense<0.000000e+00> : vector<128xf32>
    %3 = vector.multi_reduction <add>, %0, %cst [1] : vector<128x32xf32> to vector<128xf32>
    %4 = vector.shape_cast %3 : vector<128xf32> to vector<128x1xf32>
    %cst_5 = arith.constant 3.200000e+01 : f32
    %5 = vector.broadcast %cst_5 : f32 to vector<128x1xf32>
    %6 = arith.divf %4, %5 : vector<128x1xf32>
    %7 = vector.broadcast %6 : vector<128x1xf32> to vector<128x32xf32>
    %8 = arith.subf %0, %7 : vector<128x32xf32>
    %9 = arith.mulf %8, %8 : vector<128x32xf32>
    %cst_6 = arith.constant dense<0.000000e+00> : vector<128xf32>
    %10 = vector.multi_reduction <add>, %9, %cst_6 [1] : vector<128x32xf32> to vector<128xf32>
    %11 = vector.shape_cast %10 : vector<128xf32> to vector<128x1xf32>
    %cst_7 = arith.constant 3.200000e+01 : f32
    %12 = vector.broadcast %cst_7 : f32 to vector<128x1xf32>
    %13 = arith.divf %11, %12 : vector<128x1xf32>
    %14 = vector.broadcast %6 : vector<128x1xf32> to vector<128x32xf32>
    %15 = arith.subf %0, %14 : vector<128x32xf32>
    %cst_8 = arith.constant 9.99999974E-6 : f32
    %16 = vector.broadcast %cst_8 : f32 to vector<128x1xf32>
    %17 = arith.addf %13, %16 : vector<128x1xf32>
    %18 = math.rsqrt %17 : vector<128x1xf32>
    %19 = vector.broadcast %18 : vector<128x1xf32> to vector<128x32xf32>
    %20 = arith.mulf %15, %19 : vector<128x32xf32>
    %21 = vector.broadcast %1 : vector<1x32xf32> to vector<128x32xf32>
    %22 = arith.mulf %20, %21 : vector<128x32xf32>
    %23 = vector.broadcast %2 : vector<1x32xf32> to vector<128x32xf32>
    %24 = arith.addf %22, %23 : vector<128x32xf32>
    %25 = arith.truncf %24 : vector<128x32xf32> to vector<128x32xbf16>
    %c0_9 = arith.constant 0 : index
    %c0_10 = arith.constant 0 : index
    %26 = vector.load %arg4[%c0_9, %c0_10] : memref<32x128xbf16, #tpu.memory_space<vmem>>, vector<32x128xbf16>
    %cst_11 = arith.constant dense<0.000000e+00> : vector<128x128xf32>
    %27 = tpu.matmul %25, %26, %cst_11 {dimension_numbers = #tpu.dot_dimension_numbers<[1], [0], [0], [1], [0, 0, 1, 1], [], []>} : vector<128x32xbf16>, vector<32x128xbf16>, vector<128x128xf32> -> vector<128x128xf32>
    %c0_12 = arith.constant 0 : index
    %c0_13 = arith.constant 0 : index
    %28 = vector.load %arg5[%c0_12, %c0_13] : memref<1x128xf32, #tpu.memory_space<vmem>>, vector<1x128xf32>
    %29 = vector.broadcast %28 : vector<1x128xf32> to vector<128x128xf32>
    %30 = arith.addf %27, %29 : vector<128x128xf32>
    %c0_14 = arith.constant 0 : index
    %c0_15 = arith.constant 0 : index
    %31 = vector.load %arg6[%c0_14, %c0_15] : memref<128x128xf32, #tpu.memory_space<vmem>>, vector<128x128xf32>
    tpu.vector_store %arg6[%c0_14, %c0_15], %30 {strides = array<i32>} : memref<128x128xf32, #tpu.memory_space<vmem>>, vector<128x128xf32>,
    return
  }
  func.func @transform_0(%arg0: i32) -> (i32, i32) {
    %c0_i32 = arith.constant 0 : i32
    %c0_i32_0 = arith.constant 0 : i32
    return %arg0, %c0_i32 : i32, i32
  }
  func.func @transform_1(%arg0: i32) -> (i32, i32) {
    %c0_i32 = arith.constant 0 : i32
    %c0_i32_0 = arith.constant 0 : i32
    %c0_i32_1 = arith.constant 0 : i32
    return %c0_i32, %c0_i32_0 : i32, i32
  }
  func.func @transform_2(%arg0: i32) -> (i32, i32) {
    %c0_i32 = arith.constant 0 : i32
    %c0_i32_0 = arith.constant 0 : i32
    %c0_i32_1 = arith.constant 0 : i32
    return %c0_i32, %c0_i32_0 : i32, i32
  }
  func.func @transform_3(%arg0: i32) -> (i32, i32) {
    %c0_i32 = arith.constant 0 : i32
    %c0_i32_0 = arith.constant 0 : i32
    %c0_i32_1 = arith.constant 0 : i32
    return %c0_i32, %c0_i32_0 : i32, i32
  }
  func.func @transform_4(%arg0: i32) -> (i32, i32) {
    %c0_i32 = arith.constant 0 : i32
    %c0_i32_0 = arith.constant 0 : i32
    %c0_i32_1 = arith.constant 0 : i32
    return %c0_i32, %c0_i32_0 : i32, i32
  }
  func.func @transform_5(%arg0: i32) -> (i32, i32) {
    %c0_i32 = arith.constant 0 : i32
    %c0_i32_0 = arith.constant 0 : i32
    return %arg0, %c0_i32 : i32, i32
  }
}

</mosaic_0001>

<llo_original>
// kernel: tpu_custom_call.1
$region0: #{tpu_custom_call.1}
  #allocation0 [shape = 'u32[]', space=smem, size = 0x4, offset = 0x4, fixed_abs, tag = 'smem constant byte address 0x4 - core index']
  #allocation1 [shape = 'u32[144,128]{1,0:T(1,128)}', space=vmem, size = 0x12000, scoped, tag = 'internal scratch']
  %s0 = inlined_call_operand.vmem [shape: f32[128,32], index: 0, kind: input, shape index: {}]
  %s1 = inlined_call_operand.vmem [shape: f32[1,32], index: 1, kind: input, shape index: {}]
  %s2 = inlined_call_operand.vmem [shape: f32[1,32], index: 2, kind: input, shape index: {}]
  %s3 = inlined_call_operand.vmem [shape: bf16[32,128], index: 3, kind: input, shape index: {}]
  %s4 = inlined_call_operand.vmem [shape: f32[1,128], index: 4, kind: input, shape index: {}]
  %s5 = inlined_call_operand.hbm [shape: f32[128,128], index: 5, kind: output, shape index: {}]
  %s6 = sld [smem:[#allocation0]]
  $region30: #{tpu_custom_call.1} parent=0
    _
  %s8 = ssub.s32 1, %s6
  %s9 = scalar_select 0, %s8, %s6
  $region1: #{tpu_custom_call.1} parent=0
    #allocation2 [shape = 'u8[65536]{0}', space=vmem, size = 0x10000, scoped, tag = 'output window, operand 0, single buffered']
    #allocation3 [shape = 's32[1]{0}', space=sflag, size = 0x4, scoped, tag = 'scoped memory for tpu_custom_call.1']
    %10 = vsyncpa [#allocation3], 0
    // Predicated region
    $region2: #{tpu_custom_call.1} parent=1 // pred_check
      _
    $region3: #{tpu_custom_call.1} parent=1 // pred_check_branch
      %12 = sbr.rel (0) target = $region5
    $region4: #{tpu_custom_call.1} parent=1 // pred_region
      _
    $region5: #{tpu_custom_call.1} parent=1 // pred_fallthru
      _
    // Predicated region
    $region6: #{tpu_custom_call.1} parent=1 // pred_check
      _
    $region7: #{tpu_custom_call.1} parent=1 // pred_check_branch
      %14 = sbr.rel (0) target = $region9
    $region8: #{tpu_custom_call.1} parent=1 // pred_region
      _
    $region9: #{tpu_custom_call.1} parent=1 // pred_fallthru
      _
    // Predicated region
    $region10: #{tpu_custom_call.1} parent=1 // pred_check
      _
    $region11: #{tpu_custom_call.1} parent=1 // pred_check_branch
      %16 = sbr.rel (0) target = $region13
    $region12: #{tpu_custom_call.1} parent=1 // pred_region
      _
    $region13: #{tpu_custom_call.1} parent=1 // pred_fallthru
      _
    // Predicated region
    $region14: #{tpu_custom_call.1} parent=1 // pred_check
      _
    $region15: #{tpu_custom_call.1} parent=1 // pred_check_branch
      %18 = sbr.rel (0) target = $region17
    $region16: #{tpu_custom_call.1} parent=1 // pred_region
      _
    $region17: #{tpu_custom_call.1} parent=1 // pred_fallthru
      _
    // Predicated region
    $region18: #{tpu_custom_call.1} parent=1 // pred_check
      _
    $region19: #{tpu_custom_call.1} parent=1 // pred_check_branch
      %20 = sbr.rel (0) target = $region21
    $region20: #{tpu_custom_call.1} parent=1 // pred_region
      _
    $region21: #{tpu_custom_call.1} parent=1 // pred_fallthru
      _
    %v22 = vld [vmem:[%s0] sm:$0xff]
    %v23 = vld [vmem:[%s0 + $0x8] sm:$0xff]
    %v24 = vld [vmem:[%s0 + $0x10] sm:$0xff]
    %v25 = vld [vmem:[%s0 + $0x18] sm:$0xff]
    %v26 = vld [vmem:[%s0 + $0x20] sm:$0xff]
    %v27 = vld [vmem:[%s0 + $0x28] sm:$0xff]
    %v28 = vld [vmem:[%s0 + $0x30] sm:$0xff]
    %v29 = vld [vmem:[%s0 + $0x38] sm:$0xff]
    %v30 = vld [vmem:[%s0 + $0x40] sm:$0xff]
    %v31 = vld [vmem:[%s0 + $0x48] sm:$0xff]
    %v32 = vld [vmem:[%s0 + $0x50] sm:$0xff]
    %v33 = vld [vmem:[%s0 + $0x58] sm:$0xff]
    %v34 = vld [vmem:[%s0 + $0x60] sm:$0xff]
    %v35 = vld [vmem:[%s0 + $0x68] sm:$0xff]
    %v36 = vld [vmem:[%s0 + $0x70] sm:$0xff]
    %v37 = vld [vmem:[%s0 + $0x78] sm:$0xff]
    %v38 = vld [vmem:[%s1] sm:$0x1]
    %v39 = vld [vmem:[%s2] sm:$0x1]
    %vm40 = vcmask 261120
    %v41 = vsel %vm40, %v22, 0.0
    %42 = vadd.xlane.f32.xlu0 %v41
    %v43 = vpop.xlane.xlu0 %42
    %v44 = vsel %vm40, %v23, 0.0
    %45 = vadd.xlane.f32.xlu0 %v44
    %v46 = vpop.xlane.xlu0 %45
    %v47 = vsel %vm40, %v24, 0.0
    %48 = vadd.xlane.f32.xlu0 %v47
    %v49 = vpop.xlane.xlu0 %48
    %v50 = vsel %vm40, %v25, 0.0
    %51 = vadd.xlane.f32.xlu0 %v50
    %v52 = vpop.xlane.xlu0 %51
    %v53 = vsel %vm40, %v26, 0.0
    %54 = vadd.xlane.f32.xlu0 %v53
    %v55 = vpop.xlane.xlu0 %54
    %v56 = vsel %vm40, %v27, 0.0
    %57 = vadd.xlane.f32.xlu0 %v56
    %v58 = vpop.xlane.xlu0 %57
    %v59 = vsel %vm40, %v28, 0.0
    %60 = vadd.xlane.f32.xlu0 %v59
    %v61 = vpop.xlane.xlu0 %60
    %v62 = vsel %vm40, %v29, 0.0
    %63 = vadd.xlane.f32.xlu0 %v62
    %v64 = vpop.xlane.xlu0 %63
    %v65 = vsel %vm40, %v30, 0.0
    %66 = vadd.xlane.f32.xlu0 %v65
    %v67 = vpop.xlane.xlu0 %66
    %v68 = vsel %vm40, %v31, 0.0
    %69 = vadd.xlane.f32.xlu0 %v68
    %v70 = vpop.xlane.xlu0 %69
    %v71 = vsel %vm40, %v32, 0.0
    %72 = vadd.xlane.f32.xlu0 %v71
    %v73 = vpop.xlane.xlu0 %72
    %v74 = vsel %vm40, %v33, 0.0
    %75 = vadd.xlane.f32.xlu0 %v74
    %v76 = vpop.xlane.xlu0 %75
    %v77 = vsel %vm40, %v34, 0.0
    %78 = vadd.xlane.f32.xlu0 %v77
    %v79 = vpop.xlane.xlu0 %78
    %v80 = vsel %vm40, %v35, 0.0
    %81 = vadd.xlane.f32.xlu0 %v80
    %v82 = vpop.xlane.xlu0 %81
    %v83 = vsel %vm40, %v36, 0.0
    %84 = vadd.xlane.f32.xlu0 %v83
    %v85 = vpop.xlane.xlu0 %84
    %v86 = vsel %vm40, %v37, 0.0
    %87 = vadd.xlane.f32.xlu0 %v86
    %v88 = vpop.xlane.xlu0 %87
    %v89 = vrcp.pop 32.0
    %v90 = vmul.f32 %v43, %v89
    %v91 = vmul.f32 %v46, %v89
    %v92 = vmul.f32 %v49, %v89
    %v93 = vmul.f32 %v52, %v89
    %v94 = vmul.f32 %v55, %v89
    %v95 = vmul.f32 %v58, %v89
    %v96 = vmul.f32 %v61, %v89
    %v97 = vmul.f32 %v64, %v89
    %v98 = vmul.f32 %v67, %v89
    %v99 = vmul.f32 %v70, %v89
    %v100 = vmul.f32 %v73, %v89
    %v101 = vmul.f32 %v76, %v89
    %v102 = vmul.f32 %v79, %v89
    %v103 = vmul.f32 %v82, %v89
    %v104 = vmul.f32 %v85, %v89
    %v105 = vmul.f32 %v88, %v89
    %v106 = vsub.f32 %v22, %v90
    %v107 = vsub.f32 %v23, %v91
    %v108 = vsub.f32 %v24, %v92
    %v109 = vsub.f32 %v25, %v93
    %v110 = vsub.f32 %v26, %v94
    %v111 = vsub.f32 %v27, %v95
    %v112 = vsub.f32 %v28, %v96
    %v113 = vsub.f32 %v29, %v97
    %v114 = vsub.f32 %v30, %v98
    %v115 = vsub.f32 %v31, %v99
    %v116 = vsub.f32 %v32, %v100
    %v117 = vsub.f32 %v33, %v101
    %v118 = vsub.f32 %v34, %v102
    %v119 = vsub.f32 %v35, %v103
    %v120 = vsub.f32 %v36, %v104
    %v121 = vsub.f32 %v37, %v105
    %v122 = vmul.f32 %v106, %v106
    %v123 = vmul.f32 %v107, %v107
    %v124 = vmul.f32 %v108, %v108
    %v125 = vmul.f32 %v109, %v109
    %v126 = vmul.f32 %v110, %v110
    %v127 = vmul.f32 %v111, %v111
    %v128 = vmul.f32 %v112, %v112
    %v129 = vmul.f32 %v113, %v113
    %v130 = vmul.f32 %v114, %v114
    %v131 = vmul.f32 %v115, %v115
    %v132 = vmul.f32 %v116, %v116
    %v133 = vmul.f32 %v117, %v117
    %v134 = vmul.f32 %v118, %v118
    %v135 = vmul.f32 %v119, %v119
    %v136 = vmul.f32 %v120, %v120
    %v137 = vmul.f32 %v121, %v121
    %v138 = vsel %vm40, %v122, 0.0
    %139 = vadd.xlane.f32.xlu0 %v138
    %v140 = vpop.xlane.xlu0 %139
    %v141 = vsel %vm40, %v123, 0.0
    %142 = vadd.xlane.f32.xlu0 %v141
    %v143 = vpop.xlane.xlu0 %142
    %v144 = vsel %vm40, %v124, 0.0
    %145 = vadd.xlane.f32.xlu0 %v144
    %v146 = vpop.xlane.xlu0 %145
    %v147 = vsel %vm40, %v125, 0.0
    %148 = vadd.xlane.f32.xlu0 %v147
    %v149 = vpop.xlane.xlu0 %148
    %v150 = vsel %vm40, %v126, 0.0
    %151 = vadd.xlane.f32.xlu0 %v150
    %v152 = vpop.xlane.xlu0 %151
    %v153 = vsel %vm40, %v127, 0.0
    %154 = vadd.xlane.f32.xlu0 %v153
    %v155 = vpop.xlane.xlu0 %154
    %v156 = vsel %vm40, %v128, 0.0
    %157 = vadd.xlane.f32.xlu0 %v156
    %v158 = vpop.xlane.xlu0 %157
    %v159 = vsel %vm40, %v129, 0.0
    %160 = vadd.xlane.f32.xlu0 %v159
    %v161 = vpop.xlane.xlu0 %160
    %v162 = vsel %vm40, %v130, 0.0
    %163 = vadd.xlane.f32.xlu0 %v162
    %v164 = vpop.xlane.xlu0 %163
    %v165 = vsel %vm40, %v131, 0.0
    %166 = vadd.xlane.f32.xlu0 %v165
    %v167 = vpop.xlane.xlu0 %166
    %v168 = vsel %vm40, %v132, 0.0
    %169 = vadd.xlane.f32.xlu0 %v168
    %v170 = vpop.xlane.xlu0 %169
    %v171 = vsel %vm40, %v133, 0.0
    %172 = vadd.xlane.f32.xlu0 %v171
    %v173 = vpop.xlane.xlu0 %172
    %v174 = vsel %vm40, %v134, 0.0
    %175 = vadd.xlane.f32.xlu0 %v174
    %v176 = vpop.xlane.xlu0 %175
    %v177 = vsel %vm40, %v135, 0.0
    %178 = vadd.xlane.f32.xlu0 %v177
    %v179 = vpop.xlane.xlu0 %178
    %v180 = vsel %vm40, %v136, 0.0
    %181 = vadd.xlane.f32.xlu0 %v180
    %v182 = vpop.xlane.xlu0 %181
    %v183 = vsel %vm40, %v137, 0.0
    %184 = vadd.xlane.f32.xlu0 %v183
    %v185 = vpop.xlane.xlu0 %184
    %v186 = vmul.f32 %v140, %v89
    %v187 = vmul.f32 %v143, %v89
    %v188 = vmul.f32 %v146, %v89
    %v189 = vmul.f32 %v149, %v89
    %v190 = vmul.f32 %v152, %v89
    %v191 = vmul.f32 %v155, %v89
    %v192 = vmul.f32 %v158, %v89
    %v193 = vmul.f32 %v161, %v89
    %v194 = vmul.f32 %v164, %v89
    %v195 = vmul.f32 %v167, %v89
    %v196 = vmul.f32 %v170, %v89
    %v197 = vmul.f32 %v173, %v89
    %v198 = vmul.f32 %v176, %v89
    %v199 = vmul.f32 %v179, %v89
    %v200 = vmul.f32 %v182, %v89
    %v201 = vmul.f32 %v185, %v89
    %v202 = vadd.f32 %v186, 1e-05
    %v203 = vadd.f32 %v187, 1e-05
    %v204 = vadd.f32 %v188, 1e-05
    %v205 = vadd.f32 %v189, 1e-05
    %v206 = vadd.f32 %v190, 1e-05
    %v207 = vadd.f32 %v191, 1e-05
    %v208 = vadd.f32 %v192, 1e-05
    %v209 = vadd.f32 %v193, 1e-05
    %v210 = vadd.f32 %v194, 1e-05
    %v211 = vadd.f32 %v195, 1e-05
    %v212 = vadd.f32 %v196, 1e-05
    %v213 = vadd.f32 %v197, 1e-05
    %v214 = vadd.f32 %v198, 1e-05
    %v215 = vadd.f32 %v199, 1e-05
    %v216 = vadd.f32 %v200, 1e-05
    %v217 = vadd.f32 %v201, 1e-05
    %v218 = vrsqrt.pop %v202
    %v219 = vrsqrt.pop %v203
    %v220 = vrsqrt.pop %v204
    %v221 = vrsqrt.pop %v205
    %v222 = vrsqrt.pop %v206
    %v223 = vrsqrt.pop %v207
    %v224 = vrsqrt.pop %v208
    %v225 = vrsqrt.pop %v209
    %v226 = vrsqrt.pop %v210
    %v227 = vrsqrt.pop %v211
    %v228 = vrsqrt.pop %v212
    %v229 = vrsqrt.pop %v213
    %v230 = vrsqrt.pop %v214
    %v231 = vrsqrt.pop %v215
    %v232 = vrsqrt.pop %v216
    %v233 = vrsqrt.pop %v217
    %v234 = vmul.f32 %v106, %v218
    %v235 = vmul.f32 %v107, %v219
    %v236 = vmul.f32 %v108, %v220
    %v237 = vmul.f32 %v109, %v221
    %v238 = vmul.f32 %v110, %v222
    %v239 = vmul.f32 %v111, %v223
    %v240 = vmul.f32 %v112, %v224
    %v241 = vmul.f32 %v113, %v225
    %v242 = vmul.f32 %v114, %v226
    %v243 = vmul.f32 %v115, %v227
    %v244 = vmul.f32 %v116, %v228
    %v245 = vmul.f32 %v117, %v229
    %v246 = vmul.f32 %v118, %v230
    %v247 = vmul.f32 %v119, %v231
    %v248 = vmul.f32 %v120, %v232
    %v249 = vmul.f32 %v121, %v233
    %v251 = vlaneseq
    %v252 = vshrl.u32 %v251, 7
    %v253 = vsub.s32 0, %v252
    %v254 = vrot.slane %v38, %v253
    %v256 = vmul.f32 %v234, %v254
    %v257 = vmul.f32 %v235, %v254
    %v258 = vmul.f32 %v236, %v254
    %v259 = vmul.f32 %v237, %v254
    %v260 = vmul.f32 %v238, %v254
    %v261 = vmul.f32 %v239, %v254
    %v262 = vmul.f32 %v240, %v254
    %v263 = vmul.f32 %v241, %v254
    %v264 = vmul.f32 %v242, %v254
    %v265 = vmul.f32 %v243, %v254
    %v266 = vmul.f32 %v244, %v254
    %v267 = vmul.f32 %v245, %v254
    %v268 = vmul.f32 %v246, %v254
    %v269 = vmul.f32 %v247, %v254
    %v270 = vmul.f32 %v248, %v254
    %v271 = vmul.f32 %v249, %v254
    %v273 = vlaneseq
    %v274 = vshrl.u32 %v273, 7
    %v275 = vsub.s32 0, %v274
    %v276 = vrot.slane %v39, %v275
    %v278 = vadd.f32 %v256, %v276
    %v279 = vadd.f32 %v257, %v276
    %v280 = vadd.f32 %v258, %v276
    %v281 = vadd.f32 %v259, %v276
    %v282 = vadd.f32 %v260, %v276
    %v283 = vadd.f32 %v261, %v276
    %v284 = vadd.f32 %v262, %v276
    %v285 = vadd.f32 %v263, %v276
    %v286 = vadd.f32 %v264, %v276
    %v287 = vadd.f32 %v265, %v276
    %v288 = vadd.f32 %v266, %v276
    %v289 = vadd.f32 %v267, %v276
    %v290 = vadd.f32 %v268, %v276
    %v291 = vadd.f32 %v269, %v276
    %v292 = vadd.f32 %v270, %v276
    %v293 = vadd.f32 %v271, %v276
    %v294 = vpack.c.bf16 %v279, %v278
    %v295 = vpack.c.bf16 %v281, %v280
    %v296 = vpack.c.bf16 %v283, %v282
    %v297 = vpack.c.bf16 %v285, %v284
    %v298 = vpack.c.bf16 %v287, %v286
    %v299 = vpack.c.bf16 %v289, %v288
    %v300 = vpack.c.bf16 %v291, %v290
    %v301 = vpack.c.bf16 %v293, %v292
    %v302 = vld [vmem:[%s3] sm:$0xf]
    %v303 = vld [vmem:[%s3 + $0x4] sm:$0xf]
    %v304 = vld [vmem:[%s3 + $0x8] sm:$0xf]
    %v305 = vld [vmem:[%s3 + $0xc] sm:$0xf]
    %v306 = vld [vmem:[%s4] sm:$0x1]
    %v308 = vlaneseq
    %v309 = vshrl.u32 %v308, 7
    %v310 = vsub.s32 0, %v309
    %v311 = vrot.slane %v306, %v310
    %v317 = vunpack.c.l.b16 %v302
    %v318 = vunpack.c.l.b16 %v303
    %v319 = vunpack.c.l.b16 %v304
    %v320 = vunpack.c.l.b16 %v305
    %v321 = vpack.c.b16 %v318, %v317
    %v322 = vpack.c.b16 %v320, %v319
    %v326 = vsel %vm40, %v294, 0
    %v329 = vsel %vm40, %v295, 0
    %v332 = vsel %vm40, %v296, 0
    %v335 = vsel %vm40, %v297, 0
    %v338 = vsel %vm40, %v298, 0
    %v341 = vsel %vm40, %v299, 0
    %v344 = vsel %vm40, %v300, 0
    %v347 = vsel %vm40, %v301, 0
    %349 = vmatprep.subr.bf16.mxu0 0
    %350 = vmatpush1.bf16.msra.mxu0 %v321
    %351 = vmatprep.subr.bf16.mxu0 0
    %352 = vmatpush1.bf16.msra.mxu0 %v322
    %353 = vmatprep.subr.bf16.mxu0 0
    %354 = vmatpush1.bf16.msra.mxu0 0
    %355 = vmatprep.subr.bf16.mxu0 0
    %356 = vmatpush1.bf16.msra.mxu0 0
    %357 = vmatprep.subr.bf16.mxu0 0
    %358 = vmatpush1.bf16.msra.mxu0 0
    %359 = vmatprep.subr.bf16.mxu0 0
    %360 = vmatpush1.bf16.msra.mxu0 0
    %361 = vmatprep.subr.bf16.mxu0 0
    %362 = vmatpush1.bf16.msra.mxu0 0
    %363 = vmatprep.subr.bf16.mxu0 0
    %364 = vmatpush1.bf16.msra.mxu0 0
    %365 = vmatprep.subr.bf16.mxu0 0
    %366 = vmatpush1.bf16.msra.mxu0 0
    %367 = vmatprep.subr.bf16.mxu0 0
    %368 = vmatpush1.bf16.msra.mxu0 0
    %369 = vmatprep.subr.bf16.mxu0 0
    %370 = vmatpush1.bf16.msra.mxu0 0
    %371 = vmatprep.subr.bf16.mxu0 0
    %372 = vmatpush1.bf16.msra.mxu0 0
    %373 = vmatprep.subr.bf16.mxu0 0
    %374 = vmatpush1.bf16.msra.mxu0 0
    %375 = vmatprep.subr.bf16.mxu0 0
    %376 = vmatpush1.bf16.msra.mxu0 0
    %377 = vmatprep.subr.bf16.mxu0 0
    %378 = vmatpush1.bf16.msra.mxu0 0
    %379 = vmatprep.subr.bf16.mxu0 0
    %380 = vmatpush1.bf16.msra.mxu0 0
    %381 = vmatprep.mubr.bf16.mxu0 0
    %382 = vmatmul.mubr.bf16.gmra.mrb[0].mxu0 %v326
    %v383 = vpop.f32.mrb[0].mxu0
    %v384 = vadd.f32 %v311, %v383
    %v385 = vpop.f32.mrb[0].mxu0
    %v386 = vpop.f32.mrb[0].mxu0
    %v387 = vadd.f32 %v311, %v386
    %v388 = vpop.f32.mrb[0].mxu0
    %389 = vmatprep.mubr.bf16.mxu0 0
    %390 = vmatmul.mubr.bf16.gmra.mrb[0].mxu0 %v329
    %v391 = vpop.f32.mrb[0].mxu0
    %v392 = vadd.f32 %v311, %v391
    %v393 = vpop.f32.mrb[0].mxu0
    %v394 = vpop.f32.mrb[0].mxu0
    %v395 = vadd.f32 %v311, %v394
    %v396 = vpop.f32.mrb[0].mxu0
    %397 = vmatprep.mubr.bf16.mxu0 0
    %398 = vmatmul.mubr.bf16.gmra.mrb[0].mxu0 %v332
    %v399 = vpop.f32.mrb[0].mxu0
    %v400 = vadd.f32 %v311, %v399
    %v401 = vpop.f32.mrb[0].mxu0
    %v402 = vpop.f32.mrb[0].mxu0
    %v403 = vadd.f32 %v311, %v402
    %v404 = vpop.f32.mrb[0].mxu0
    %405 = vmatprep.mubr.bf16.mxu0 0
    %406 = vmatmul.mubr.bf16.gmra.mrb[0].mxu0 %v335
    %v407 = vpop.f32.mrb[0].mxu0
    %v408 = vadd.f32 %v311, %v407
    %v409 = vpop.f32.mrb[0].mxu0
    %v410 = vpop.f32.mrb[0].mxu0
    %v411 = vadd.f32 %v311, %v410
    %v412 = vpop.f32.mrb[0].mxu0
    %413 = vmatprep.mubr.bf16.mxu0 0
    %414 = vmatmul.mubr.bf16.gmra.mrb[0].mxu0 %v338
    %v415 = vpop.f32.mrb[0].mxu0
    %v416 = vadd.f32 %v311, %v415
    %v417 = vpop.f32.mrb[0].mxu0
    %v418 = vpop.f32.mrb[0].mxu0
    %v419 = vadd.f32 %v311, %v418
    %v420 = vpop.f32.mrb[0].mxu0
    %421 = vmatprep.mubr.bf16.mxu0 0
    %422 = vmatmul.mubr.bf16.gmra.mrb[0].mxu0 %v341
    %v423 = vpop.f32.mrb[0].mxu0
    %v424 = vadd.f32 %v311, %v423
    %v425 = vpop.f32.mrb[0].mxu0
    %v426 = vpop.f32.mrb[0].mxu0
    %v427 = vadd.f32 %v311, %v426
    %v428 = vpop.f32.mrb[0].mxu0
    %429 = vmatprep.mubr.bf16.mxu0 0
    %430 = vmatmul.mubr.bf16.gmra.mrb[0].mxu0 %v344
    %v431 = vpop.f32.mrb[0].mxu0
    %v432 = vadd.f32 %v311, %v431
    %v433 = vpop.f32.mrb[0].mxu0
    %v434 = vpop.f32.mrb[0].mxu0
    %v435 = vadd.f32 %v311, %v434
    %v436 = vpop.f32.mrb[0].mxu0
    %437 = vmatprep.mubr.bf16.mxu0 0
    %438 = vmatmul.mubr.bf16.gmra.mrb[0].mxu0 %v347
    %v439 = vpop.f32.mrb[0].mxu0
    %v440 = vadd.f32 %v311, %v439
    %v441 = vpop.f32.mrb[0].mxu0
    %v442 = vpop.f32.mrb[0].mxu0
    %v443 = vadd.f32 %v311, %v442
    %v444 = vpop.f32.mrb[0].mxu0
    %445 = vdwg.mxu0
    %446 = vst [vmem:[#allocation2] sm:$0xff] %v384
    %447 = vst [vmem:[#allocation2 + $0x8] sm:$0xff] %v387
    %448 = vst [vmem:[#allocation2 + $0x10] sm:$0xff] %v392
    %449 = vst [vmem:[#allocation2 + $0x18] sm:$0xff] %v395
    %450 = vst [vmem:[#allocation2 + $0x20] sm:$0xff] %v400
    %451 = vst [vmem:[#allocation2 + $0x28] sm:$0xff] %v403
    %452 = vst [vmem:[#allocation2 + $0x30] sm:$0xff] %v408
    %453 = vst [vmem:[#allocation2 + $0x38] sm:$0xff] %v411
    %454 = vst [vmem:[#allocation2 + $0x40] sm:$0xff] %v416
    %455 = vst [vmem:[#allocation2 + $0x48] sm:$0xff] %v419
    %456 = vst [vmem:[#allocation2 + $0x50] sm:$0xff] %v424
    %457 = vst [vmem:[#allocation2 + $0x58] sm:$0xff] %v427
    %458 = vst [vmem:[#allocation2 + $0x60] sm:$0xff] %v432
    %459 = vst [vmem:[#allocation2 + $0x68] sm:$0xff] %v435
    %460 = vst [vmem:[#allocation2 + $0x70] sm:$0xff] %v440
    %461 = vst [vmem:[#allocation2 + $0x78] sm:$0xff] %v443
    // Predicated region
    $region22: #{tpu_custom_call.1} parent=1 // pred_check
      _
    $region23: #{tpu_custom_call.1} parent=1 // pred_check_branch
      %463 = sbr.rel (0) target = $region25
    $region24: #{tpu_custom_call.1} parent=1 // pred_region
      %s465 = ssub.s32 2048, 2048
      %466 = vsyncadd [#allocation3], %s465
      %s467 = sshll.u32 [#allocation2], 4
      %s468 = int_to_ptr.vmem [resolvable:$true] %s467
      %473 = dma.vmem_to_hbm [thread:$0]  %s468, 2048, %s5, [#allocation3], 128, 128, 8
    $region25: #{tpu_custom_call.1} parent=1 // pred_fallthru
      _
    // Predicated region
    $region26: #{tpu_custom_call.1} parent=1 // pred_check
      _
    $region27: #{tpu_custom_call.1} parent=1 // pred_check_branch
      %475 = sbr.rel (0) target = $region29
    $region28: #{tpu_custom_call.1} parent=1 // pred_region
      %476 = dma.done [#allocation3], 2048
    $region29: #{tpu_custom_call.1} parent=1 // pred_fallthru
      _
    %477 = vsyncpa [#allocation3], 1

</llo_original>
